<compile_context>
chip_gen: v6e
topology: v6e:2x2x1
jax: 0.10.0
libtpu: 0.0.40
codegen_flags: <defaults>
</compile_context>

<pallas_src>
import numpy as np
import jax
import jax.numpy as jnp
from jax.experimental import pallas as pl
from jax.experimental.pallas import tpu as pltpu

# ----------------------------- static problem sizes -----------------------------
B = 2
CIN, H, W = 2, 8, 4
C1 = 16
C2 = 32
H1, W1 = H // 2, W // 2          # after pool1: 4 x 2
H2, W2 = H1 // 2, W1 // 2        # after pool2: 2 x 1
NDIR = 4
HIDDEN = 128
LEN_OUTPUT = 4
N_SP = H2 * W2                   # spatial slots feeding fc1 (= 2)
N0 = B * H * W                   # 64 rows entering conv1 / pool1
N1 = B * H1 * W1                 # 16 rows entering conv2 / pool2
N2 = B * H2 * W2                 # 4 rows after pool2 (slot-major)

_REF_PREC = jax.lax.Precision.HIGHEST   # reference (outside the kernel) only


# ----------------------- host-side compile-time constants ------------------------
def _pool_sel_np(Hc, Wc, slot_major):
    """0/1 matrix picking the top-left row of each 2x2 window (built once, host)."""
    Ho, Wo = Hc // 2, Wc // 2
    n_out, n_in = B * Ho * Wo, B * Hc * Wc
    sel = np.zeros((n_out, n_in), np.float32)
    for o in range(n_out):
        if slot_major:                       # output rows ordered (slot, b)
            s, b = o // B, o % B
        else:                                # output rows ordered (b, ho, wo)
            b, s = o // (Ho * Wo), o % (Ho * Wo)
        ho, wo = s // Wo, s % Wo
        sel[o, b * Hc * Wc + 2 * ho * Wc + 2 * wo] = 1.0
    return sel


def _conv_mask_np(Hc, Wc, cin):
    """(rows, 9*cin) validity mask for the in-kernel conv2 im2col (kills halo/wrap)."""
    n = B * Hc * Wc
    mask = np.zeros((n, 9 * cin), np.float32)
    taps = [(ky, kx) for ky in range(3) for kx in range(3)]
    for r in range(n):
        h = (r // Wc) % Hc
        w = r % Wc
        for t, (ky, kx) in enumerate(taps):
            dh, dw = ky - 1, kx - 1
            if 0 <= h + dh < Hc and 0 <= w + dw < Wc:
                mask[r, t * cin:(t + 1) * cin] = 1.0
    return mask


# ----------------------------------- kernel -------------------------------------
def dqn_kernel(x_ref, dir_ref, w1_ref, w2_ref, wfc1_ref, wfc2_ref,
               bias_ref, mask2_ref, sel1_ref, sel2_ref, out_ref):
    # packed biases: row 0 = conv1, 1 = conv2, 2 = fc1, 3 = fc2 (zero-padded to 128)
    b1 = bias_ref[0:1, 0:C1]
    b2 = bias_ref[1:2, 0:C2]
    bfc1 = bias_ref[2:3, 0:HIDDEN]
    bfc2 = bias_ref[3:4, 0:LEN_OUTPUT]

    # conv1 + bias + ReLU: im2col slab was prepared in the wrapper -> one MXU matmul
    y1 = jnp.dot(x_ref[...], w1_ref[...], preferred_element_type=jnp.float32)
    y1 = jnp.maximum(y1 + b1, 0.0)                                 # (64, 16)

    # pool1: 2 sublane rolls + 2 VPU maxes + constant 0/1 compaction matmul.
    # roll(y, N0-1)[r] = y[r+1]; wraps on last rows are never selected by sel1.
    m1 = jnp.maximum(y1, pltpu.roll(y1, N0 - 1, 0))                # {0, +1}
    m1 = jnp.maximum(m1, pltpu.roll(m1, N0 - W, 0))                # {0, +1, +W, +W+1}
    p1 = jnp.dot(sel1_ref[...], m1, preferred_element_type=jnp.float32)   # (16, 16)

    # conv2: in-kernel im2col = 6 unique rolls + lane concat + ONE mask multiply,
    # then a single MXU matmul with K = 9*C1 = 144.
    rolled = {0: p1}
    slabs = []
    for ky in range(3):
        for kx in range(3):
            d = (ky - 1) * W1 + (kx - 1)                 # flat row offset of tap
            if d not in rolled:
                rolled[d] = pltpu.roll(p1, (-d) % N1, 0)  # rolled[r] = p1[(r+d) % N1]
            slabs.append(rolled[d])
    im2col2 = jnp.concatenate(slabs, axis=1) * mask2_ref[...]      # (16, 144)
    y2 = jnp.dot(im2col2, w2_ref[...], preferred_element_type=jnp.float32)
    y2 = jnp.maximum(y2 + b2, 0.0)                                 # (16, 32)

    # pool2 (slot-major output rows (s, b) so fc1's flatten uses contiguous slices)
    m2 = jnp.maximum(y2, pltpu.roll(y2, N1 - 1, 0))
    m2 = jnp.maximum(m2, pltpu.roll(m2, N1 - W1, 0))
    p2 = jnp.dot(sel2_ref[...], m2, preferred_element_type=jnp.float32)   # (4, 32)

    # flatten (PyTorch NCHW order folded into wfc1 host-side) + concat dir + fc1 + fc2
    slots = [p2[s * B:(s + 1) * B, :] for s in range(N_SP)]        # each (B, C2)
    cat = jnp.concatenate(slots + [dir_ref[...]], axis=1)          # (B, N_SP*C2+NDIR)
    h = jnp.dot(cat, wfc1_ref[...], preferred_element_type=jnp.float32)
    h = jnp.maximum(h + bfc1, 0.0)                                 # (B, HIDDEN)
    # (B, 4) masked store accepted knowingly - single store, not worth padding.
    out_ref[...] = jnp.dot(h, wfc2_ref[...], preferred_element_type=jnp.float32) + bfc2


# ----------------------------- parameters (synthetic) -----------------------------
def init_params(key):
    """Deterministic synthetic parameters with PyTorch-convention shapes."""
    ks = jax.random.split(key, 8)
    conv1_w = 0.1 * jax.random.normal(ks[0], (C1, CIN, 3, 3), jnp.float32)
    conv1_b = 0.1 * jax.random.normal(ks[1], (C1,), jnp.float32)
    conv2_w = 0.1 * jax.random.normal(ks[2], (C2, C1, 3, 3), jnp.float32)
    conv2_b = 0.1 * jax.random.normal(ks[3], (C2,), jnp.float32)
    fc1_w = 0.1 * jax.random.normal(ks[4], (HIDDEN, C2 * N_SP + NDIR), jnp.float32)
    fc1_b = 0.1 * jax.random.normal(ks[5], (HIDDEN,), jnp.float32)
    fc2_w = 0.1 * jax.random.normal(ks[6], (LEN_OUTPUT, HIDDEN), jnp.float32)
    fc2_b = 0.1 * jax.random.normal(ks[7], (LEN_OUTPUT,), jnp.float32)
    return conv1_w, conv1_b, conv2_w, conv2_b, fc1_w, fc1_b, fc2_w, fc2_b


# -------------------- one-time weight repack (run ONCE, not per call) --------------
def prepare_params(params):
    conv1_w, conv1_b, conv2_w, conv2_b, fc1_w, fc1_b, fc2_w, fc2_b = params

    # conv weights stacked as (9*Cin, Cout), rows ordered (ky, kx, cin)
    w1s = jnp.transpose(conv1_w, (2, 3, 1, 0)).reshape(9 * CIN, C1)
    w2s = jnp.transpose(conv2_w, (2, 3, 1, 0)).reshape(9 * C1, C2)

    # fold PyTorch's NCHW flatten (index = c*N_SP + s) into fc1's weight so the
    # kernel's [slot0 channels | slot1 channels | direction] concat feeds one matmul
    wf = fc1_w[:, :C2 * N_SP].reshape(HIDDEN, C2, N_SP)
    wf = jnp.transpose(wf, (2, 1, 0)).reshape(N_SP * C2, HIDDEN)   # row = s*C2 + c
    wd = fc1_w[:, C2 * N_SP:].T                                    # (NDIR, HIDDEN)
    wfc1 = jnp.concatenate([wf, wd], axis=0)                       # (N_SP*C2+NDIR, HIDDEN)
    wfc2 = fc2_w.T                                                 # (HIDDEN, LEN_OUTPUT)

    # pack the four biases into a single (4, 128) input (one entry DMA instead of 4)
    bias_pack = jnp.zeros((4, 128), jnp.float32)
    bias_pack = bias_pack.at[0, :C1].set(conv1_b)
    bias_pack = bias_pack.at[1, :C2].set(conv2_b)
    bias_pack = bias_pack.at[2, :HIDDEN].set(fc1_b)
    bias_pack = bias_pack.at[3, :LEN_OUTPUT].set(fc2_b)

    # compile-time constant selection/mask matrices (host numpy, computed once)
    mask2 = jnp.asarray(_conv_mask_np(H1, W1, C1))                 # (16, 144)
    sel1 = jnp.asarray(_pool_sel_np(H, W, slot_major=False))       # (16, 64)
    sel2 = jnp.asarray(_pool_sel_np(H1, W1, slot_major=True))      # (4, 16)

    return (w1s, w2s, wfc1, wfc2, bias_pack, mask2, sel1, sel2)


# ---------------------------------- forward wrapper -------------------------------
@jax.jit
def agent_dqn_forward(x_nchw, direction, packed):
    w1s, w2s, wfc1, wfc2, bias_pack, mask2, sel1, sel2 = packed

    # x-dependent layout plumbing only: NCHW -> channels-last rows (b, h, w) and
    # conv1's im2col slab (ky, kx, cin columns), fused by XLA in one layout pass.
    xcl = jnp.transpose(x_nchw, (0, 2, 3, 1))                      # (B, H, W, CIN)
    xp = jnp.pad(xcl, ((0, 0), (1, 1), (1, 1), (0, 0)))
    slabs = [xp[:, ky:ky + H, kx:kx + W, :] for ky in range(3) for kx in range(3)]
    x_im2col = jnp.concatenate(slabs, axis=-1).reshape(N0, 9 * CIN)  # (64, 18)

    return pl.pallas_call(
        dqn_kernel,
        out_shape=jax.ShapeDtypeStruct((B, LEN_OUTPUT), jnp.float32),
    )(x_im2col, direction.astype(jnp.float32),
      w1s, w2s, wfc1, wfc2, bias_pack, mask2, sel1, sel2)


# -------------------------- pure-JAX reference (checking) --------------------------
def reference_forward(x_nchw, direction, params):
    conv1_w, conv1_b, conv2_w, conv2_b, fc1_w, fc1_b, fc2_w, fc2_b = params
    dn = ('NCHW', 'OIHW', 'NCHW')
    y = jax.lax.conv_general_dilated(x_nchw, conv1_w, (1, 1), ((1, 1), (1, 1)),
                                     dimension_numbers=dn, precision=_REF_PREC)
    y = jnp.maximum(y + conv1_b[None, :, None, None], 0.0)
    y = jax.lax.reduce_window(y, -jnp.inf, jax.lax.max, (1, 1, 2, 2), (1, 1, 2, 2), 'VALID')
    y = jax.lax.conv_general_dilated(y, conv2_w, (1, 1), ((1, 1), (1, 1)),
                                     dimension_numbers=dn, precision=_REF_PREC)
    y = jnp.maximum(y + conv2_b[None, :, None, None], 0.0)
    y = jax.lax.reduce_window(y, -jnp.inf, jax.lax.max, (1, 1, 2, 2), (1, 1, 2, 2), 'VALID')
    flat = y.reshape(y.shape[0], -1)                      # PyTorch x.view(B, -1) on NCHW
    z = jnp.concatenate([flat, direction], axis=1)
    z = jnp.maximum(jnp.dot(z, fc1_w.T, precision=_REF_PREC) + fc1_b, 0.0)
    return jnp.dot(z, fc2_w.T, precision=_REF_PREC) + fc2_b


# ------------------------------------ main -----------------------------------------
if __name__ == "__main__":
    key = jax.random.PRNGKey(0)
    kx, kd, kp = jax.random.split(key, 3)
    x = jax.random.normal(kx, (B, CIN, H, W), jnp.float32)      # NCHW, PyTorch convention
    direction = jax.random.normal(kd, (B, NDIR), jnp.float32)
    params = init_params(kp)

    packed = jax.block_until_ready(prepare_params(params))      # one-time repack

    out = agent_dqn_forward(x, direction, packed)
    out = jax.block_until_ready(out)

    ref = reference_forward(x, direction, params)
    np.testing.assert_allclose(np.asarray(out), np.asarray(ref), rtol=2e-2, atol=2e-2)
    print("KERNEL_OK")
</pallas_src>

<mosaic_0001>
module attributes {stable_mosaic.version = 11 : i64} {
  func.func @dqn_kernel(%arg0: memref<64x18xf32, #tpu.memory_space<vmem>>, %arg1: memref<2x4xf32, #tpu.memory_space<vmem>>, %arg2: memref<18x16xf32, #tpu.memory_space<vmem>>, %arg3: memref<144x32xf32, #tpu.memory_space<vmem>>, %arg4: memref<68x128xf32, #tpu.memory_space<vmem>>, %arg5: memref<128x4xf32, #tpu.memory_space<vmem>>, %arg6: memref<4x128xf32, #tpu.memory_space<vmem>>, %arg7: memref<16x144xf32, #tpu.memory_space<vmem>>, %arg8: memref<16x64xf32, #tpu.memory_space<vmem>>, %arg9: memref<4x16xf32, #tpu.memory_space<vmem>>, %arg10: memref<2x4xf32, #tpu.memory_space<vmem>>) attributes {dimension_semantics = [], scalar_prefetch = 0 : i64, scratch_operands = 0 : i64, tpu.core_type = #tpu.core_type<tc>} {
    %c0 = arith.constant 0 : index
    %c0_0 = arith.constant 0 : index
    %0 = vector.load %arg6[%c0, %c0_0] : memref<4x128xf32, #tpu.memory_space<vmem>>, vector<1x16xf32>
    %c1 = arith.constant 1 : index
    %c0_1 = arith.constant 0 : index
    %1 = vector.load %arg6[%c1, %c0_1] : memref<4x128xf32, #tpu.memory_space<vmem>>, vector<1x32xf32>
    %c2 = arith.constant 2 : index
    %c0_2 = arith.constant 0 : index
    %2 = vector.load %arg6[%c2, %c0_2] : memref<4x128xf32, #tpu.memory_space<vmem>>, vector<1x128xf32>
    %c3 = arith.constant 3 : index
    %c0_3 = arith.constant 0 : index
    %3 = vector.load %arg6[%c3, %c0_3] : memref<4x128xf32, #tpu.memory_space<vmem>>, vector<1x4xf32>
    %c0_4 = arith.constant 0 : index
    %c0_5 = arith.constant 0 : index
    %4 = vector.load %arg0[%c0_4, %c0_5] : memref<64x18xf32, #tpu.memory_space<vmem>>, vector<64x18xf32>
    %c0_6 = arith.constant 0 : index
    %c0_7 = arith.constant 0 : index
    %5 = vector.load %arg2[%c0_6, %c0_7] : memref<18x16xf32, #tpu.memory_space<vmem>>, vector<18x16xf32>
    %cst = arith.constant dense<0.000000e+00> : vector<64x16xf32>
    %6 = tpu.matmul %4, %5, %cst {dimension_numbers = #tpu.dot_dimension_numbers<[1], [0], [0], [1], [0, 0, 1, 1], [], []>} : vector<64x18xf32>, vector<18x16xf32>, vector<64x16xf32> -> vector<64x16xf32>
    %7 = vector.broadcast %0 : vector<1x16xf32> to vector<64x16xf32>
    %8 = arith.addf %6, %7 : vector<64x16xf32>
    %cst_8 = arith.constant 0.000000e+00 : f32
    %9 = vector.broadcast %cst_8 : f32 to vector<64x16xf32>
    %10 = arith.maximumf %8, %9 : vector<64x16xf32>
    %c63_i32 = arith.constant 63 : i32
    %11 = tpu.dynamic_rotate %10 by %c63_i32 dim 0 : vector<64x16xf32>, i32 -> vector<64x16xf32>
    %12 = arith.maximumf %10, %11 : vector<64x16xf32>
    %c60_i32 = arith.constant 60 : i32
    %13 = tpu.dynamic_rotate %12 by %c60_i32 dim 0 : vector<64x16xf32>, i32 -> vector<64x16xf32>
    %14 = arith.maximumf %12, %13 : vector<64x16xf32>
    %c0_9 = arith.constant 0 : index
    %c0_10 = arith.constant 0 : index
    %15 = vector.load %arg8[%c0_9, %c0_10] : memref<16x64xf32, #tpu.memory_space<vmem>>, vector<16x64xf32>
    %cst_11 = arith.constant dense<0.000000e+00> : vector<16x16xf32>
    %16 = tpu.matmul %15, %14, %cst_11 {dimension_numbers = #tpu.dot_dimension_numbers<[1], [0], [0], [1], [0, 0, 1, 1], [], []>} : vector<16x64xf32>, vector<64x16xf32>, vector<16x16xf32> -> vector<16x16xf32>
    %c3_i32 = arith.constant 3 : i32
    %17 = tpu.dynamic_rotate %16 by %c3_i32 dim 0 : vector<16x16xf32>, i32 -> vector<16x16xf32>
    %c2_i32 = arith.constant 2 : i32
    %18 = tpu.dynamic_rotate %16 by %c2_i32 dim 0 : vector<16x16xf32>, i32 -> vector<16x16xf32>
    %c1_i32 = arith.constant 1 : i32
    %19 = tpu.dynamic_rotate %16 by %c1_i32 dim 0 : vector<16x16xf32>, i32 -> vector<16x16xf32>
    %c15_i32 = arith.constant 15 : i32
    %20 = tpu.dynamic_rotate %16 by %c15_i32 dim 0 : vector<16x16xf32>, i32 -> vector<16x16xf32>
    %c14_i32 = arith.constant 14 : i32
    %21 = tpu.dynamic_rotate %16 by %c14_i32 dim 0 : vector<16x16xf32>, i32 -> vector<16x16xf32>
    %c13_i32 = arith.constant 13 : i32
    %22 = tpu.dynamic_rotate %16 by %c13_i32 dim 0 : vector<16x16xf32>, i32 -> vector<16x16xf32>
    %23 = tpu.concatenate %17, %18, %19, %19, %16, %20, %20, %21, %22 in 1 : vector<16x16xf32>, vector<16x16xf32>, vector<16x16xf32>, vector<16x16xf32>, vector<16x16xf32>, vector<16x16xf32>, vector<16x16xf32>, vector<16x16xf32>, vector<16x16xf32> -> vector<16x144xf32>
    %c0_12 = arith.constant 0 : index
    %c0_13 = arith.constant 0 : index
    %24 = vector.load %arg7[%c0_12, %c0_13] : memref<16x144xf32, #tpu.memory_space<vmem>>, vector<16x144xf32>
    %25 = arith.mulf %23, %24 : vector<16x144xf32>
    %c0_14 = arith.constant 0 : index
    %c0_15 = arith.constant 0 : index
    %26 = vector.load %arg3[%c0_14, %c0_15] : memref<144x32xf32, #tpu.memory_space<vmem>>, vector<144x32xf32>
    %cst_16 = arith.constant dense<0.000000e+00> : vector<16x32xf32>
    %27 = tpu.matmul %25, %26, %cst_16 {dimension_numbers = #tpu.dot_dimension_numbers<[1], [0], [0], [1], [0, 0, 1, 1], [], []>} : vector<16x144xf32>, vector<144x32xf32>, vector<16x32xf32> -> vector<16x32xf32>
    %28 = vector.broadcast %1 : vector<1x32xf32> to vector<16x32xf32>
    %29 = arith.addf %27, %28 : vector<16x32xf32>
    %cst_17 = arith.constant 0.000000e+00 : f32
    %30 = vector.broadcast %cst_17 : f32 to vector<16x32xf32>
    %31 = arith.maximumf %29, %30 : vector<16x32xf32>
    %c15_i32_18 = arith.constant 15 : i32
    %32 = tpu.dynamic_rotate %31 by %c15_i32_18 dim 0 : vector<16x32xf32>, i32 -> vector<16x32xf32>
    %33 = arith.maximumf %31, %32 : vector<16x32xf32>
    %c14_i32_19 = arith.constant 14 : i32
    %34 = tpu.dynamic_rotate %33 by %c14_i32_19 dim 0 : vector<16x32xf32>, i32 -> vector<16x32xf32>
    %35 = arith.maximumf %33, %34 : vector<16x32xf32>
    %c0_20 = arith.constant 0 : index
    %c0_21 = arith.constant 0 : index
    %36 = vector.load %arg9[%c0_20, %c0_21] : memref<4x16xf32, #tpu.memory_space<vmem>>, vector<4x16xf32>
    %cst_22 = arith.constant dense<0.000000e+00> : vector<4x32xf32>
    %37 = tpu.matmul %36, %35, %cst_22 {dimension_numbers = #tpu.dot_dimension_numbers<[1], [0], [0], [1], [0, 0, 1, 1], [], []>} : vector<4x16xf32>, vector<16x32xf32>, vector<4x32xf32> -> vector<4x32xf32>
    %38 = vector.extract_strided_slice %37 {offsets = [0, 0], sizes = [2, 32], strides = [1, 1]} : vector<4x32xf32> to vector<2x32xf32>
    %39 = vector.extract_strided_slice %37 {offsets = [2, 0], sizes = [2, 32], strides = [1, 1]} : vector<4x32xf32> to vector<2x32xf32>
    %c0_23 = arith.constant 0 : index
    %c0_24 = arith.constant 0 : index
    %40 = vector.load %arg1[%c0_23, %c0_24] : memref<2x4xf32, #tpu.memory_space<vmem>>, vector<2x4xf32>
    %41 = tpu.concatenate %38, %39, %40 in 1 : vector<2x32xf32>, vector<2x32xf32>, vector<2x4xf32> -> vector<2x68xf32>
    %c0_25 = arith.constant 0 : index
    %c0_26 = arith.constant 0 : index
    %42 = vector.load %arg4[%c0_25, %c0_26] : memref<68x128xf32, #tpu.memory_space<vmem>>, vector<68x128xf32>
    %cst_27 = arith.constant dense<0.000000e+00> : vector<2x128xf32>
    %43 = tpu.matmul %41, %42, %cst_27 {dimension_numbers = #tpu.dot_dimension_numbers<[1], [0], [0], [1], [0, 0, 1, 1], [], []>} : vector<2x68xf32>, vector<68x128xf32>, vector<2x128xf32> -> vector<2x128xf32>
    %44 = vector.broadcast %2 : vector<1x128xf32> to vector<2x128xf32>
    %45 = arith.addf %43, %44 : vector<2x128xf32>
    %cst_28 = arith.constant 0.000000e+00 : f32
    %46 = vector.broadcast %cst_28 : f32 to vector<2x128xf32>
    %47 = arith.maximumf %45, %46 : vector<2x128xf32>
    %c0_29 = arith.constant 0 : index
    %c0_30 = arith.constant 0 : index
    %48 = vector.load %arg5[%c0_29, %c0_30] : memref<128x4xf32, #tpu.memory_space<vmem>>, vector<128x4xf32>
    %cst_31 = arith.constant dense<0.000000e+00> : vector<2x4xf32>
    %49 = tpu.matmul %47, %48, %cst_31 {dimension_numbers = #tpu.dot_dimension_numbers<[1], [0], [0], [1], [0, 0, 1, 1], [], []>} : vector<2x128xf32>, vector<128x4xf32>, vector<2x4xf32> -> vector<2x4xf32>
    %50 = vector.broadcast %3 : vector<1x4xf32> to vector<2x4xf32>
    %51 = arith.addf %49, %50 : vector<2x4xf32>
    %c0_32 = arith.constant 0 : index
    %c0_33 = arith.constant 0 : index
    %52 = vector.load %arg10[%c0_32, %c0_33] : memref<2x4xf32, #tpu.memory_space<vmem>>, vector<2x4xf32>
    tpu.vector_store %arg10[%c0_32, %c0_33], %51 {strides = array<i32>} : memref<2x4xf32, #tpu.memory_space<vmem>>, vector<2x4xf32>,
    return
  }
}

</mosaic_0001>

<llo_original>
// kernel: agent_dqn_forward.1
$region0: #{agent_dqn_forward.1}
  #allocation0 [shape = 'u32[]', space=smem, size = 0x4, offset = 0x4, fixed_abs, tag = 'smem constant byte address 0x4 - core index']
  #allocation1 [shape = 'u32[144,128]{1,0:T(1,128)}', space=vmem, size = 0x12000, scoped, tag = 'internal scratch']
  %s0 = inlined_call_operand.vmem [shape: f32[64,18], index: 0, kind: input, shape index: {}]
  %s1 = inlined_call_operand.vmem [shape: f32[2,4], index: 1, kind: input, shape index: {}]
  %s2 = inlined_call_operand.vmem [shape: f32[18,16], index: 2, kind: input, shape index: {}]
  %s3 = inlined_call_operand.vmem [shape: f32[144,32], index: 3, kind: input, shape index: {}]
  %s4 = inlined_call_operand.vmem [shape: f32[68,128], index: 4, kind: input, shape index: {}]
  %s5 = inlined_call_operand.vmem [shape: f32[128,4], index: 5, kind: input, shape index: {}]
  %s6 = inlined_call_operand.vmem [shape: f32[4,128], index: 6, kind: input, shape index: {}]
  %s7 = inlined_call_operand.vmem [shape: f32[16,144], index: 7, kind: input, shape index: {}]
  %s8 = inlined_call_operand.vmem [shape: f32[16,64], index: 8, kind: input, shape index: {}]
  %s9 = inlined_call_operand.vmem [shape: f32[4,16], index: 9, kind: input, shape index: {}]
  %s10 = inlined_call_operand.hbm [shape: f32[2,4], index: 10, kind: output, shape index: {}]
  %s11 = sld [smem:[#allocation0]]
  $region50: #{agent_dqn_forward.1} parent=0
    _
  %s13 = ssub.s32 1, %s11
  %s14 = scalar_select 0, %s13, %s11
  $region1: #{agent_dqn_forward.1} parent=0
    #allocation2 [shape = 'u8[1024]{0}', space=vmem, size = 0x400, scoped, tag = 'output window, operand 0, single buffered']
    #allocation3 [shape = 's32[1]{0}', space=sflag, size = 0x4, scoped, tag = 'scoped memory for agent_dqn_forward.1']
    %15 = vsyncpa [#allocation3], 0
    // Predicated region
    $region2: #{agent_dqn_forward.1} parent=1 // pred_check
      _
    $region3: #{agent_dqn_forward.1} parent=1 // pred_check_branch
      %17 = sbr.rel (0) target = $region5
    $region4: #{agent_dqn_forward.1} parent=1 // pred_region
      _
    $region5: #{agent_dqn_forward.1} parent=1 // pred_fallthru
      _
    // Predicated region
    $region6: #{agent_dqn_forward.1} parent=1 // pred_check
      _
    $region7: #{agent_dqn_forward.1} parent=1 // pred_check_branch
      %19 = sbr.rel (0) target = $region9
    $region8: #{agent_dqn_forward.1} parent=1 // pred_region
      _
    $region9: #{agent_dqn_forward.1} parent=1 // pred_fallthru
      _
    // Predicated region
    $region10: #{agent_dqn_forward.1} parent=1 // pred_check
      _
    $region11: #{agent_dqn_forward.1} parent=1 // pred_check_branch
      %21 = sbr.rel (0) target = $region13
    $region12: #{agent_dqn_forward.1} parent=1 // pred_region
      _
    $region13: #{agent_dqn_forward.1} parent=1 // pred_fallthru
      _
    // Predicated region
    $region14: #{agent_dqn_forward.1} parent=1 // pred_check
      _
    $region15: #{agent_dqn_forward.1} parent=1 // pred_check_branch
      %23 = sbr.rel (0) target = $region17
    $region16: #{agent_dqn_forward.1} parent=1 // pred_region
      _
    $region17: #{agent_dqn_forward.1} parent=1 // pred_fallthru
      _
    // Predicated region
    $region18: #{agent_dqn_forward.1} parent=1 // pred_check
      _
    $region19: #{agent_dqn_forward.1} parent=1 // pred_check_branch
      %25 = sbr.rel (0) target = $region21
    $region20: #{agent_dqn_forward.1} parent=1 // pred_region
      _
    $region21: #{agent_dqn_forward.1} parent=1 // pred_fallthru
      _
    // Predicated region
    $region22: #{agent_dqn_forward.1} parent=1 // pred_check
      _
    $region23: #{agent_dqn_forward.1} parent=1 // pred_check_branch
      %27 = sbr.rel (0) target = $region25
    $region24: #{agent_dqn_forward.1} parent=1 // pred_region
      _
    $region25: #{agent_dqn_forward.1} parent=1 // pred_fallthru
      _
    // Predicated region
    $region26: #{agent_dqn_forward.1} parent=1 // pred_check
      _
    $region27: #{agent_dqn_forward.1} parent=1 // pred_check_branch
      %29 = sbr.rel (0) target = $region29
    $region28: #{agent_dqn_forward.1} parent=1 // pred_region
      _
    $region29: #{agent_dqn_forward.1} parent=1 // pred_fallthru
      _
    // Predicated region
    $region30: #{agent_dqn_forward.1} parent=1 // pred_check
      _
    $region31: #{agent_dqn_forward.1} parent=1 // pred_check_branch
      %31 = sbr.rel (0) target = $region33
    $region32: #{agent_dqn_forward.1} parent=1 // pred_region
      _
    $region33: #{agent_dqn_forward.1} parent=1 // pred_fallthru
      _
    // Predicated region
    $region34: #{agent_dqn_forward.1} parent=1 // pred_check
      _
    $region35: #{agent_dqn_forward.1} parent=1 // pred_check_branch
      %33 = sbr.rel (0) target = $region37
    $region36: #{agent_dqn_forward.1} parent=1 // pred_region
      _
    $region37: #{agent_dqn_forward.1} parent=1 // pred_fallthru
      _
    // Predicated region
    $region38: #{agent_dqn_forward.1} parent=1 // pred_check
      _
    $region39: #{agent_dqn_forward.1} parent=1 // pred_check_branch
      %35 = sbr.rel (0) target = $region41
    $region40: #{agent_dqn_forward.1} parent=1 // pred_region
      _
    $region41: #{agent_dqn_forward.1} parent=1 // pred_fallthru
      _
    %v36 = vld [vmem:[%s6] sm:$0x1]
    %v37 = vld [vmem:[%s6 + $0x1] sm:$0x1]
    %v38 = vld [vmem:[%s6 + $0x2] sm:$0x1]
    %v39 = vld [vmem:[%s6 + $0x3] sm:$0x1]
    %v40 = vld [vmem:[%s0] sm:$0xff]
    %v41 = vld [vmem:[%s0 + $0x8] sm:$0xff]
    %v42 = vld [vmem:[%s0 + $0x10] sm:$0xff]
    %v43 = vld [vmem:[%s0 + $0x18] sm:$0xff]
    %v44 = vld [vmem:[%s0 + $0x20] sm:$0xff]
    %v45 = vld [vmem:[%s0 + $0x28] sm:$0xff]
    %v46 = vld [vmem:[%s0 + $0x30] sm:$0xff]
    %v47 = vld [vmem:[%s0 + $0x38] sm:$0xff]
    %v48 = vld [vmem:[%s2] sm:$0xff]
    %v49 = vld [vmem:[%s2 + $0x8] sm:$0xff]
    %v50 = vld [vmem:[%s2 + $0x10] sm:$0x3]
    %v51 = vlaneseq
    %v52 = vshrl.u32 %v51, 7
    %v53 = vsub.s32 0, %v52
    %v54 = vrot.slane %v36, %v53
    %vm55 = vcmask 146432
    %v57 = vsel %vm55, %v40, 0
    %v60 = vsel %vm55, %v41, 0
    %v63 = vsel %vm55, %v42, 0
    %v66 = vsel %vm55, %v43, 0
    %v69 = vsel %vm55, %v44, 0
    %v72 = vsel %vm55, %v45, 0
    %v75 = vsel %vm55, %v46, 0
    %v78 = vsel %vm55, %v47, 0
    %vm80 = vcmask 1041408
    %v82 = vsel %vm80, %v50, 0
    %84 = vmatprep.subr.mxu0 0.0
    %85 = vmatpush1.msra.mxu0 0.0
    %86 = vmatprep.subr.mxu0 0.0
    %87 = vmatpush1.msra.mxu0 0.0
    %88 = vmatprep.subr.mxu0 0.0
    %89 = vmatpush1.msra.mxu0 0.0
    %90 = vmatprep.subr.mxu0 0.0
    %91 = vmatpush1.msra.mxu0 0.0
    %92 = vmatprep.subr.mxu0 0.0
    %93 = vmatpush1.msra.mxu0 0.0
    %94 = vmatprep.subr.mxu0 0.0
    %95 = vmatpush1.msra.mxu0 0.0
    %96 = vmatprep.subr.mxu0 0.0
    %97 = vmatpush1.msra.mxu0 0.0
    %98 = vmatprep.subr.mxu0 0.0
    %99 = vmatpush1.msra.mxu0 0.0
    %100 = vmatprep.subr.mxu0 0.0
    %101 = vmatpush1.msra.mxu0 0.0
    %102 = vmatprep.subr.mxu0 0.0
    %103 = vmatpush1.msra.mxu0 0.0
    %104 = vmatprep.subr.mxu0 0.0
    %105 = vmatpush1.msra.mxu0 0.0
    %106 = vmatprep.subr.mxu0 0.0
    %107 = vmatpush1.msra.mxu0 0.0
    %108 = vmatprep.subr.mxu0 0.0
    %109 = vmatpush1.msra.mxu0 0.0
    %110 = vmatprep.subr.mxu0 0.0
    %111 = vmatpush1.msra.mxu0 %v82
    %112 = vmatprep.subr.mxu0 0.0
    %113 = vmatpush1.msra.mxu0 %v49
    %114 = vmatprep.subr.mxu0 0.0
    %115 = vmatpush1.msra.mxu0 %v48
    %116 = vmatprep.subr.mxu0 0.0
    %117 = vmatpush2.msra.mxu0 0.0
    %118 = vmatprep.subr.mxu0 0.0
    %119 = vmatpush2.msra.mxu0 0.0
    %120 = vmatprep.subr.mxu0 0.0
    %121 = vmatpush2.msra.mxu0 0.0
    %122 = vmatprep.subr.mxu0 0.0
    %123 = vmatpush2.msra.mxu0 0.0
    %124 = vmatprep.subr.mxu0 0.0
    %125 = vmatpush2.msra.mxu0 0.0
    %126 = vmatprep.subr.mxu0 0.0
    %127 = vmatpush2.msra.mxu0 0.0
    %128 = vmatprep.subr.mxu0 0.0
    %129 = vmatpush2.msra.mxu0 0.0
    %130 = vmatprep.subr.mxu0 0.0
    %131 = vmatpush2.msra.mxu0 0.0
    %132 = vmatprep.subr.mxu0 0.0
    %133 = vmatpush2.msra.mxu0 0.0
    %134 = vmatprep.subr.mxu0 0.0
    %135 = vmatpush2.msra.mxu0 0.0
    %136 = vmatprep.subr.mxu0 0.0
    %137 = vmatpush2.msra.mxu0 0.0
    %138 = vmatprep.subr.mxu0 0.0
    %139 = vmatpush2.msra.mxu0 0.0
    %140 = vmatprep.subr.mxu0 0.0
    %141 = vmatpush2.msra.mxu0 0.0
    %142 = vmatprep.subr.mxu0 0.0
    %143 = vmatpush2.msra.mxu0 0.0
    %144 = vmatprep.subr.mxu0 0.0
    %145 = vmatpush2.msra.mxu0 0.0
    %146 = vmatprep.subr.mxu0 0.0
    %147 = vmatpush2.msra.mxu0 0.0
    %148 = vmatprep.mubr.f32.mxu0 0.0
    %149 = vmatmul.mubr.f32.gmra.mxu0 %v57
    %v150 = vpop.f32.mrf.mxu0
    %v151 = vadd.f32 %v54, %v150
    %v152 = vpop.f32.mrf.mxu0
    %153 = vmatprep.mubr.f32.mxu0 0.0
    %154 = vmatmul.mubr.f32.gmra.mxu0 %v60
    %v155 = vpop.f32.mrf.mxu0
    %v156 = vadd.f32 %v54, %v155
    %v157 = vpop.f32.mrf.mxu0
    %158 = vmatprep.mubr.f32.mxu0 0.0
    %159 = vmatmul.mubr.f32.gmra.mxu0 %v63
    %v160 = vpop.f32.mrf.mxu0
    %v161 = vadd.f32 %v54, %v160
    %v162 = vpop.f32.mrf.mxu0
    %163 = vmatprep.mubr.f32.mxu0 0.0
    %164 = vmatmul.mubr.f32.gmra.mxu0 %v66
    %v165 = vpop.f32.mrf.mxu0
    %v166 = vadd.f32 %v54, %v165
    %v167 = vpop.f32.mrf.mxu0
    %168 = vmatprep.mubr.f32.mxu0 0.0
    %169 = vmatmul.mubr.f32.gmra.mxu0 %v69
    %v170 = vpop.f32.mrf.mxu0
    %v171 = vadd.f32 %v54, %v170
    %v172 = vpop.f32.mrf.mxu0
    %173 = vmatprep.mubr.f32.mxu0 0.0
    %174 = vmatmul.mubr.f32.gmra.mxu0 %v72
    %v175 = vpop.f32.mrf.mxu0
    %v176 = vadd.f32 %v54, %v175
    %v177 = vpop.f32.mrf.mxu0
    %178 = vmatprep.mubr.f32.mxu0 0.0
    %179 = vmatmul.mubr.f32.gmra.mxu0 %v75
    %v180 = vpop.f32.mrf.mxu0
    %v181 = vadd.f32 %v54, %v180
    %v182 = vpop.f32.mrf.mxu0
    %183 = vmatprep.mubr.f32.mxu0 0.0
    %184 = vmatmul.mubr.f32.gmra.mxu0 %v78
    %v185 = vpop.f32.mrf.mxu0
    %v186 = vadd.f32 %v54, %v185
    %v187 = vpop.f32.mrf.mxu0
    %188 = vdwg.mxu0
    %v189 = vmax.f32 %v151, 0.0
    %v190 = vmax.f32 %v156, 0.0
    %v191 = vmax.f32 %v161, 0.0
    %v192 = vmax.f32 %v166, 0.0
    %v193 = vmax.f32 %v171, 0.0
    %v194 = vmax.f32 %v176, 0.0
    %v195 = vmax.f32 %v181, 0.0
    %v196 = vmax.f32 %v186, 0.0
    %v197 = vrot.slane %v189, 1
    %v198 = vrot.slane %v190, 1
    %v199 = vrot.slane %v191, 1
    %v200 = vrot.slane %v192, 1
    %v201 = vrot.slane %v193, 1
    %v202 = vrot.slane %v194, 1
    %v203 = vrot.slane %v195, 1
    %v204 = vrot.slane %v196, 1
    %v205 = vlaneseq
    %v206 = vshrl.u32 %v205, 7
    %vm207 = vcmp.lt.s32.totalorder %v206, 7
    %v208 = vsel %vm207, %v203, %v204
    %v209 = vsel %vm207, %v202, %v203
    %v210 = vsel %vm207, %v201, %v202
    %v211 = vsel %vm207, %v200, %v201
    %v212 = vsel %vm207, %v199, %v200
    %v213 = vsel %vm207, %v198, %v199
    %v214 = vsel %vm207, %v197, %v198
    %v215 = vsel %vm207, %v204, %v197
    %v216 = vmax.f32 %v189, %v214
    %v217 = vmax.f32 %v190, %v213
    %v218 = vmax.f32 %v191, %v212
    %v219 = vmax.f32 %v192, %v211
    %v220 = vmax.f32 %v193, %v210
    %v221 = vmax.f32 %v194, %v209
    %v222 = vmax.f32 %v195, %v208
    %v223 = vmax.f32 %v196, %v215
    %v224 = vrot.slane %v216, 4
    %v225 = vrot.slane %v217, 4
    %v226 = vrot.slane %v218, 4
    %v227 = vrot.slane %v219, 4
    %v228 = vrot.slane %v220, 4
    %v229 = vrot.slane %v221, 4
    %v230 = vrot.slane %v222, 4
    %v231 = vrot.slane %v223, 4
    %vm232 = vcmp.lt.s32.totalorder %v206, 4
    %v233 = vsel %vm232, %v230, %v231
    %v234 = vsel %vm232, %v229, %v230
    %v235 = vsel %vm232, %v228, %v229
    %v236 = vsel %vm232, %v227, %v228
    %v237 = vsel %vm232, %v226, %v227
    %v238 = vsel %vm232, %v225, %v226
    %v239 = vsel %vm232, %v224, %v225
    %v240 = vsel %vm232, %v231, %v224
    %v241 = vmax.f32 %v216, %v239
    %v242 = vmax.f32 %v217, %v238
    %v243 = vmax.f32 %v218, %v237
    %v244 = vmax.f32 %v219, %v236
    %v245 = vmax.f32 %v220, %v235
    %v246 = vmax.f32 %v221, %v234
    %v247 = vmax.f32 %v222, %v233
    %v248 = vmax.f32 %v223, %v240
    %v249 = vld [vmem:[%s8] sm:$0xff]
    %v250 = vld [vmem:[%s8 + $0x8] sm:$0xff]
    %vm251 = vcmask 523264
    %v253 = vsel %vm251, %v249, 0
    %v256 = vsel %vm251, %v250, 0
    %258 = vmatprep.subr.mxu0 0.0
    %259 = vmatpush1.msra.mxu0 0.0
    %260 = vmatprep.subr.mxu0 0.0
    %261 = vmatpush1.msra.mxu0 0.0
    %262 = vmatprep.subr.mxu0 0.0
    %263 = vmatpush1.msra.mxu0 0.0
    %264 = vmatprep.subr.mxu0 0.0
    %265 = vmatpush1.msra.mxu0 0.0
    %266 = vmatprep.subr.mxu0 0.0
    %267 = vmatpush1.msra.mxu0 0.0
    %268 = vmatprep.subr.mxu0 0.0
    %269 = vmatpush1.msra.mxu0 0.0
    %270 = vmatprep.subr.mxu0 0.0
    %271 = vmatpush1.msra.mxu0 0.0
    %272 = vmatprep.subr.mxu0 0.0
    %273 = vmatpush1.msra.mxu0 0.0
    %274 = vmatprep.subr.mxu0 0.0
    %275 = vmatpush1.msra.mxu0 %v248
    %276 = vmatprep.subr.mxu0 0.0
    %277 = vmatpush1.msra.mxu0 %v247
    %278 = vmatprep.subr.mxu0 0.0
    %279 = vmatpush1.msra.mxu0 %v246
    %280 = vmatprep.subr.mxu0 0.0
    %281 = vmatpush1.msra.mxu0 %v245
    %282 = vmatprep.subr.mxu0 0.0
    %283 = vmatpush1.msra.mxu0 %v244
    %284 = vmatprep.subr.mxu0 0.0
    %285 = vmatpush1.msra.mxu0 %v243
    %286 = vmatprep.subr.mxu0 0.0
    %287 = vmatpush1.msra.mxu0 %v242
    %288 = vmatprep.subr.mxu0 0.0
    %289 = vmatpush1.msra.mxu0 %v241
    %290 = vmatprep.subr.mxu0 0.0
    %291 = vmatpush2.msra.mxu0 0.0
    %292 = vmatprep.subr.mxu0 0.0
    %293 = vmatpush2.msra.mxu0 0.0
    %294 = vmatprep.subr.mxu0 0.0
    %295 = vmatpush2.msra.mxu0 0.0
    %296 = vmatprep.subr.mxu0 0.0
    %297 = vmatpush2.msra.mxu0 0.0
    %298 = vmatprep.subr.mxu0 0.0
    %299 = vmatpush2.msra.mxu0 0.0
    %300 = vmatprep.subr.mxu0 0.0
    %301 = vmatpush2.msra.mxu0 0.0
    %302 = vmatprep.subr.mxu0 0.0
    %303 = vmatpush2.msra.mxu0 0.0
    %304 = vmatprep.subr.mxu0 0.0
    %305 = vmatpush2.msra.mxu0 0.0
    %306 = vmatprep.subr.mxu0 0.0
    %307 = vmatpush2.msra.mxu0 0.0
    %308 = vmatprep.subr.mxu0 0.0
    %309 = vmatpush2.msra.mxu0 0.0
    %310 = vmatprep.subr.mxu0 0.0
    %311 = vmatpush2.msra.mxu0 0.0
    %312 = vmatprep.subr.mxu0 0.0
    %313 = vmatpush2.msra.mxu0 0.0
    %314 = vmatprep.subr.mxu0 0.0
    %315 = vmatpush2.msra.mxu0 0.0
    %316 = vmatprep.subr.mxu0 0.0
    %317 = vmatpush2.msra.mxu0 0.0
    %318 = vmatprep.subr.mxu0 0.0
    %319 = vmatpush2.msra.mxu0 0.0
    %320 = vmatprep.subr.mxu0 0.0
    %321 = vmatpush2.msra.mxu0 0.0
    %322 = vmatprep.mubr.f32.mxu0 0.0
    %323 = vmatmul.mubr.f32.gmra.mxu0 %v253
    %v324 = vpop.f32.mrf.mxu0
    %v325 = vadd.f32 0.0, %v324
    %v326 = vpop.f32.mrf.mxu0
    %327 = vmatprep.mubr.f32.mxu0 0.0
    %328 = vmatmul.mubr.f32.gmra.mxu0 %v256
    %v329 = vpop.f32.mrf.mxu0
    %v330 = vadd.f32 0.0, %v329
    %v331 = vpop.f32.mrf.mxu0
    %332 = vdwg.mxu0
    %v333 = vrot.slane %v325, 5
    %v334 = vrot.slane %v330, 5
    %vm335 = vcmp.lt.s32.totalorder %v206, 3
    %v336 = vsel %vm335, %v333, %v334
    %v337 = vsel %vm335, %v334, %v333
    %v338 = vrot.slane %v325, 6
    %v339 = vrot.slane %v330, 6
    %vm340 = vcmp.lt.s32.totalorder %v206, 2
    %v341 = vsel %vm340, %v338, %v339
    %v342 = vsel %vm340, %v339, %v338
    %v343 = vrot.slane %v325, 7
    %v344 = vrot.slane %v330, 7
    %vm345 = vcmp.lt.s32.totalorder %v206, 1
    %v346 = vsel %vm345, %v343, %v344
    %v347 = vsel %vm345, %v344, %v343
    %v348 = vrot.slane %v325, 1
    %v349 = vrot.slane %v330, 1
    %v350 = vsel %vm207, %v348, %v349
    %v351 = vsel %vm207, %v349, %v348
    %v352 = vrot.slane %v325, 2
    %v353 = vrot.slane %v330, 2
    %vm354 = vcmp.lt.s32.totalorder %v206, 6
    %v355 = vsel %vm354, %v352, %v353
    %v356 = vsel %vm354, %v353, %v352
    %v357 = vrot.slane %v325, 3
    %v358 = vrot.slane %v330, 3
    %vm359 = vcmp.lt.s32.totalorder %v206, 5
    %v360 = vsel %vm359, %v357, %v358
    %v361 = vsel %vm359, %v358, %v357
    %364 = vrot.lane.b32.xlu0 %v342, 16
    %v365 = vpop.permute.xlu0 %364
    %366 = vrot.lane.b32.xlu0 %v341, 16
    %v367 = vpop.permute.xlu0 %366
    %372 = vrot.lane.b32.xlu0 %v347, 32
    %v373 = vpop.permute.xlu0 %372
    %374 = vrot.lane.b32.xlu0 %v346, 32
    %v375 = vpop.permute.xlu0 %374
    %378 = vrot.lane.b32.xlu0 %v347, 48
    %v379 = vpop.permute.xlu0 %378
    %380 = vrot.lane.b32.xlu0 %v346, 48
    %v381 = vpop.permute.xlu0 %380
    %386 = vrot.lane.b32.xlu0 %v325, 64
    %v387 = vpop.permute.xlu0 %386
    %388 = vrot.lane.b32.xlu0 %v330, 64
    %v389 = vpop.permute.xlu0 %388
    %394 = vrot.lane.b32.xlu0 %v350, 80
    %v395 = vpop.permute.xlu0 %394
    %396 = vrot.lane.b32.xlu0 %v351, 80
    %v397 = vpop.permute.xlu0 %396
    %400 = vrot.lane.b32.xlu0 %v350, 96
    %v401 = vpop.permute.xlu0 %400
    %402 = vrot.lane.b32.xlu0 %v351, 96
    %v403 = vpop.permute.xlu0 %402
    %408 = vrot.lane.b32.xlu0 %v355, 112
    %v409 = vpop.permute.xlu0 %408
    %410 = vrot.lane.b32.xlu0 %v356, 112
    %v411 = vpop.permute.xlu0 %410
    %vm414 = vcmask 130048
    %v415 = vsel %vm414, %v337, %v365
    %v416 = vsel %vm414, %v336, %v367
    %vm417 = vcmask 261120
    %v418 = vsel %vm417, %v415, %v373
    %v419 = vsel %vm417, %v416, %v375
    %vm420 = vcmask 392192
    %v421 = vsel %vm420, %v418, %v379
    %v422 = vsel %vm420, %v419, %v381
    %v423 = vsel %vm251, %v421, %v387
    %v424 = vsel %vm251, %v422, %v389
    %vm425 = vcmask 654336
    %v426 = vsel %vm425, %v423, %v395
    %v427 = vsel %vm425, %v424, %v397
    %vm428 = vcmask 785408
    %v429 = vsel %vm428, %v426, %v401
    %v430 = vsel %vm428, %v427, %v403
    %vm431 = vcmask 916480
    %v432 = vsel %vm431, %v429, %v409
    %v433 = vsel %vm431, %v430, %v411
    %v434 = vld [vmem:[%s7] sm:$0xff]
    %v435 = vld [vmem:[%s7 + $0x8] sm:$0xff]
    %v436 = vld [vmem:[%s7 + $0x10] sm:$0xff]
    %v437 = vld [vmem:[%s7 + $0x18] sm:$0xff]
    %v438 = vmul.f32 %v432, %v434
    %v439 = vmul.f32 %v360, %v435
    %v440 = vmul.f32 %v433, %v436
    %v441 = vmul.f32 %v361, %v437
    %v442 = vld [vmem:[%s3] sm:$0xff]
    %v443 = vld [vmem:[%s3 + $0x8] sm:$0xff]
    %v444 = vld [vmem:[%s3 + $0x10] sm:$0xff]
    %v445 = vld [vmem:[%s3 + $0x18] sm:$0xff]
    %v446 = vld [vmem:[%s3 + $0x20] sm:$0xff]
    %v447 = vld [vmem:[%s3 + $0x28] sm:$0xff]
    %v448 = vld [vmem:[%s3 + $0x30] sm:$0xff]
    %v449 = vld [vmem:[%s3 + $0x38] sm:$0xff]
    %v450 = vld [vmem:[%s3 + $0x40] sm:$0xff]
    %v451 = vld [vmem:[%s3 + $0x48] sm:$0xff]
    %v452 = vld [vmem:[%s3 + $0x50] sm:$0xff]
    %v453 = vld [vmem:[%s3 + $0x58] sm:$0xff]
    %v454 = vld [vmem:[%s3 + $0x60] sm:$0xff]
    %v455 = vld [vmem:[%s3 + $0x68] sm:$0xff]
    %v456 = vld [vmem:[%s3 + $0x70] sm:$0xff]
    %v457 = vld [vmem:[%s3 + $0x78] sm:$0xff]
    %v458 = vld [vmem:[%s3 + $0x80] sm:$0xff]
    %v459 = vld [vmem:[%s3 + $0x88] sm:$0xff]
    %v460 = vlaneseq
    %v461 = vshrl.u32 %v460, 7
    %v462 = vsub.s32 0, %v461
    %v463 = vrot.slane %v37, %v462
    %v465 = vsel %vm414, %v439, 0
    %v468 = vsel %vm414, %v441, 0
    %470 = vmatprep.subr.mxu0 0.0
    %471 = vmatpush1.msra.mxu0 %v457
    %472 = vmatprep.subr.mxu0 0.0
    %473 = vmatpush1.msra.mxu0 %v456
    %474 = vmatprep.subr.mxu0 0.0
    %475 = vmatpush1.msra.mxu0 %v455
    %476 = vmatprep.subr.mxu0 0.0
    %477 = vmatpush1.msra.mxu0 %v454
    %478 = vmatprep.subr.mxu0 0.0
    %479 = vmatpush1.msra.mxu0 %v453
    %480 = vmatprep.subr.mxu0 0.0
    %481 = vmatpush1.msra.mxu0 %v452
    %482 = vmatprep.subr.mxu0 0.0
    %483 = vmatpush1.msra.mxu0 %v451
    %484 = vmatprep.subr.mxu0 0.0
    %485 = vmatpush1.msra.mxu0 %v450
    %486 = vmatprep.subr.mxu0 0.0
    %487 = vmatpush1.msra.mxu0 %v449
    %488 = vmatprep.subr.mxu0 0.0
    %489 = vmatpush1.msra.mxu0 %v448
    %490 = vmatprep.subr.mxu0 0.0
    %491 = vmatpush1.msra.mxu0 %v447
    %492 = vmatprep.subr.mxu0 0.0
    %493 = vmatpush1.msra.mxu0 %v446
    %494 = vmatprep.subr.mxu0 0.0
    %495 = vmatpush1.msra.mxu0 %v445
    %496 = vmatprep.subr.mxu0 0.0
    %497 = vmatpush1.msra.mxu0 %v444
    %498 = vmatprep.subr.mxu0 0.0
    %499 = vmatpush1.msra.mxu0 %v443
    %500 = vmatprep.subr.mxu0 0.0
    %501 = vmatpush1.msra.mxu0 %v442
    %502 = vmatprep.subr.mxu0 0.0
    %503 = vmatpush2.msra.mxu0 0.0
    %504 = vmatprep.subr.mxu0 0.0
    %505 = vmatpush2.msra.mxu0 0.0
    %506 = vmatprep.subr.mxu0 0.0
    %507 = vmatpush2.msra.mxu0 0.0
    %508 = vmatprep.subr.mxu0 0.0
    %509 = vmatpush2.msra.mxu0 0.0
    %510 = vmatprep.subr.mxu0 0.0
    %511 = vmatpush2.msra.mxu0 0.0
    %512 = vmatprep.subr.mxu0 0.0
    %513 = vmatpush2.msra.mxu0 0.0
    %514 = vmatprep.subr.mxu0 0.0
    %515 = vmatpush2.msra.mxu0 0.0
    %516 = vmatprep.subr.mxu0 0.0
    %517 = vmatpush2.msra.mxu0 0.0
    %518 = vmatprep.subr.mxu0 0.0
    %519 = vmatpush2.msra.mxu0 0.0
    %520 = vmatprep.subr.mxu0 0.0
    %521 = vmatpush2.msra.mxu0 0.0
    %522 = vmatprep.subr.mxu0 0.0
    %523 = vmatpush2.msra.mxu0 0.0
    %524 = vmatprep.subr.mxu0 0.0
    %525 = vmatpush2.msra.mxu0 0.0
    %526 = vmatprep.subr.mxu0 0.0
    %527 = vmatpush2.msra.mxu0 0.0
    %528 = vmatprep.subr.mxu0 0.0
    %529 = vmatpush2.msra.mxu0 0.0
    %530 = vmatprep.subr.mxu0 0.0
    %531 = vmatpush2.msra.mxu0 %v459
    %532 = vmatprep.subr.mxu0 0.0
    %533 = vmatpush2.msra.mxu0 %v458
    %534 = vmatprep.mubr.f32.mxu0 %v465
    %535 = vmatmul.mubr.f32.gmra.mxu0 %v438
    %v536 = vpop.f32.mrf.mxu0
    %v537 = vadd.f32 %v463, %v536
    %v538 = vpop.f32.mrf.mxu0
    %539 = vmatprep.mubr.f32.mxu0 %v468
    %540 = vmatmul.mubr.f32.gmra.mxu0 %v440
    %v541 = vpop.f32.mrf.mxu0
    %v542 = vadd.f32 %v463, %v541
    %v543 = vpop.f32.mrf.mxu0
    %544 = vdwg.mxu0
    %v545 = vmax.f32 %v537, 0.0
    %v546 = vmax.f32 %v542, 0.0
    %v547 = vrot.slane %v545, 1
    %v548 = vrot.slane %v546, 1
    %v549 = vsel %vm207, %v547, %v548
    %v550 = vsel %vm207, %v548, %v547
    %v551 = vmax.f32 %v545, %v549
    %v552 = vmax.f32 %v546, %v550
    %v553 = vrot.slane %v551, 2
    %v554 = vrot.slane %v552, 2
    %v555 = vsel %vm354, %v553, %v554
    %v556 = vsel %vm354, %v554, %v553
    %v557 = vmax.f32 %v551, %v555
    %v558 = vmax.f32 %v552, %v556
    %v559 = vld [vmem:[%s9] sm:$0xf]
    %v561 = vsel %vm414, %v559, 0
    %563 = vmatprep.subr.mxu0 0.0
    %564 = vmatpush1.msra.mxu0 0.0
    %565 = vmatprep.subr.mxu0 0.0
    %566 = vmatpush1.msra.mxu0 0.0
    %567 = vmatprep.subr.mxu0 0.0
    %568 = vmatpush1.msra.mxu0 0.0
    %569 = vmatprep.subr.mxu0 0.0
    %570 = vmatpush1.msra.mxu0 0.0
    %571 = vmatprep.subr.mxu0 0.0
    %572 = vmatpush1.msra.mxu0 0.0
    %573 = vmatprep.subr.mxu0 0.0
    %574 = vmatpush1.msra.mxu0 0.0
    %575 = vmatprep.subr.mxu0 0.0
    %576 = vmatpush1.msra.mxu0 0.0
    %577 = vmatprep.subr.mxu0 0.0
    %578 = vmatpush1.msra.mxu0 0.0
    %579 = vmatprep.subr.mxu0 0.0
    %580 = vmatpush1.msra.mxu0 0.0
    %581 = vmatprep.subr.mxu0 0.0
    %582 = vmatpush1.msra.mxu0 0.0
    %583 = vmatprep.subr.mxu0 0.0
    %584 = vmatpush1.msra.mxu0 0.0
    %585 = vmatprep.subr.mxu0 0.0
    %586 = vmatpush1.msra.mxu0 0.0
    %587 = vmatprep.subr.mxu0 0.0
    %588 = vmatpush1.msra.mxu0 0.0
    %589 = vmatprep.subr.mxu0 0.0
    %590 = vmatpush1.msra.mxu0 0.0
    %591 = vmatprep.subr.mxu0 0.0
    %592 = vmatpush1.msra.mxu0 %v558
    %593 = vmatprep.subr.mxu0 0.0
    %594 = vmatpush1.msra.mxu0 %v557
    %595 = vmatprep.subr.mxu0 0.0
    %596 = vmatpush2.msra.mxu0 0.0
    %597 = vmatprep.subr.mxu0 0.0
    %598 = vmatpush2.msra.mxu0 0.0
    %599 = vmatprep.subr.mxu0 0.0
    %600 = vmatpush2.msra.mxu0 0.0
    %601 = vmatprep.subr.mxu0 0.0
    %602 = vmatpush2.msra.mxu0 0.0
    %603 = vmatprep.subr.mxu0 0.0
    %604 = vmatpush2.msra.mxu0 0.0
    %605 = vmatprep.subr.mxu0 0.0
    %606 = vmatpush2.msra.mxu0 0.0
    %607 = vmatprep.subr.mxu0 0.0
    %608 = vmatpush2.msra.mxu0 0.0
    %609 = vmatprep.subr.mxu0 0.0
    %610 = vmatpush2.msra.mxu0 0.0
    %611 = vmatprep.subr.mxu0 0.0
    %612 = vmatpush2.msra.mxu0 0.0
    %613 = vmatprep.subr.mxu0 0.0
    %614 = vmatpush2.msra.mxu0 0.0
    %615 = vmatprep.subr.mxu0 0.0
    %616 = vmatpush2.msra.mxu0 0.0
    %617 = vmatprep.subr.mxu0 0.0
    %618 = vmatpush2.msra.mxu0 0.0
    %619 = vmatprep.subr.mxu0 0.0
    %620 = vmatpush2.msra.mxu0 0.0
    %621 = vmatprep.subr.mxu0 0.0
    %622 = vmatpush2.msra.mxu0 0.0
    %623 = vmatprep.subr.mxu0 0.0
    %624 = vmatpush2.msra.mxu0 0.0
    %625 = vmatprep.subr.mxu0 0.0
    %626 = vmatpush2.msra.mxu0 0.0
    %627 = vmatprep.mubr.f32.mxu0 0.0
    %628 = vmatmul.mubr.f32.gmra.mxu0 %v561
    %v629 = vpop.f32.mrf.mxu0
    %v630 = vadd.f32 0.0, %v629
    %v631 = vpop.f32.mrf.mxu0
    %632 = vdwg.mxu0
    %v633 = vld [vmem:[%s1] sm:$0x3]
    %v635 = vrot.slane %v630, 2
    %636 = vrot.lane.b32.xlu0 %v635, 32
    %v637 = vpop.permute.xlu0 %636
    %640 = vrot.lane.b32.xlu0 %v633, 64
    %v641 = vpop.permute.xlu0 %640
    %v643 = vsel %vm417, %v630, %v637
    %v644 = vsel %vm251, %v643, %v641
    %v645 = vld [vmem:[%s4] sm:$0xff]
    %v646 = vld [vmem:[%s4 + $0x8] sm:$0xff]
    %v647 = vld [vmem:[%s4 + $0x10] sm:$0xff]
    %v648 = vld [vmem:[%s4 + $0x18] sm:$0xff]
    %v649 = vld [vmem:[%s4 + $0x20] sm:$0xff]
    %v650 = vld [vmem:[%s4 + $0x28] sm:$0xff]
    %v651 = vld [vmem:[%s4 + $0x30] sm:$0xff]
    %v652 = vld [vmem:[%s4 + $0x38] sm:$0xff]
    %v653 = vld [vmem:[%s4 + $0x40] sm:$0xf]
    %v654 = vlaneseq
    %v655 = vshrl.u32 %v654, 7
    %v656 = vsub.s32 0, %v655
    %v657 = vrot.slane %v38, %v656
    %vm658 = vcmask 556032
    %v660 = vsel %vm658, %v644, 0
    %vm662 = vcmask 1043456
    %v664 = vsel %vm662, %v653, 0
    %666 = vmatprep.subr.mxu0 0.0
    %667 = vmatpush1.msra.mxu0 0.0
    %668 = vmatprep.subr.mxu0 0.0
    %669 = vmatpush1.msra.mxu0 0.0
    %670 = vmatprep.subr.mxu0 0.0
    %671 = vmatpush1.msra.mxu0 0.0
    %672 = vmatprep.subr.mxu0 0.0
    %673 = vmatpush1.msra.mxu0 0.0
    %674 = vmatprep.subr.mxu0 0.0
    %675 = vmatpush1.msra.mxu0 0.0
    %676 = vmatprep.subr.mxu0 0.0
    %677 = vmatpush1.msra.mxu0 0.0
    %678 = vmatprep.subr.mxu0 0.0
    %679 = vmatpush1.msra.mxu0 0.0
    %680 = vmatprep.subr.mxu0 0.0
    %681 = vmatpush1.msra.mxu0 %v664
    %682 = vmatprep.subr.mxu0 0.0
    %683 = vmatpush1.msra.mxu0 %v652
    %684 = vmatprep.subr.mxu0 0.0
    %685 = vmatpush1.msra.mxu0 %v651
    %686 = vmatprep.subr.mxu0 0.0
    %687 = vmatpush1.msra.mxu0 %v650
    %688 = vmatprep.subr.mxu0 0.0
    %689 = vmatpush1.msra.mxu0 %v649
    %690 = vmatprep.subr.mxu0 0.0
    %691 = vmatpush1.msra.mxu0 %v648
    %692 = vmatprep.subr.mxu0 0.0
    %693 = vmatpush1.msra.mxu0 %v647
    %694 = vmatprep.subr.mxu0 0.0
    %695 = vmatpush1.msra.mxu0 %v646
    %696 = vmatprep.subr.mxu0 0.0
    %697 = vmatpush1.msra.mxu0 %v645
    %698 = vmatprep.subr.mxu0 0.0
    %699 = vmatpush2.msra.mxu0 0.0
    %700 = vmatprep.subr.mxu0 0.0
    %701 = vmatpush2.msra.mxu0 0.0
    %702 = vmatprep.subr.mxu0 0.0
    %703 = vmatpush2.msra.mxu0 0.0
    %704 = vmatprep.subr.mxu0 0.0
    %705 = vmatpush2.msra.mxu0 0.0
    %706 = vmatprep.subr.mxu0 0.0
    %707 = vmatpush2.msra.mxu0 0.0
    %708 = vmatprep.subr.mxu0 0.0
    %709 = vmatpush2.msra.mxu0 0.0
    %710 = vmatprep.subr.mxu0 0.0
    %711 = vmatpush2.msra.mxu0 0.0
    %712 = vmatprep.subr.mxu0 0.0
    %713 = vmatpush2.msra.mxu0 0.0
    %714 = vmatprep.subr.mxu0 0.0
    %715 = vmatpush2.msra.mxu0 0.0
    %716 = vmatprep.subr.mxu0 0.0
    %717 = vmatpush2.msra.mxu0 0.0
    %718 = vmatprep.subr.mxu0 0.0
    %719 = vmatpush2.msra.mxu0 0.0
    %720 = vmatprep.subr.mxu0 0.0
    %721 = vmatpush2.msra.mxu0 0.0
    %722 = vmatprep.subr.mxu0 0.0
    %723 = vmatpush2.msra.mxu0 0.0
    %724 = vmatprep.subr.mxu0 0.0
    %725 = vmatpush2.msra.mxu0 0.0
    %726 = vmatprep.subr.mxu0 0.0
    %727 = vmatpush2.msra.mxu0 0.0
    %728 = vmatprep.subr.mxu0 0.0
    %729 = vmatpush2.msra.mxu0 0.0
    %730 = vmatprep.mubr.f32.mxu0 0.0
    %731 = vmatmul.mubr.f32.gmra.mxu0 %v660
    %v732 = vpop.f32.mrf.mxu0
    %v733 = vadd.f32 %v657, %v732
    %v734 = vpop.f32.mrf.mxu0
    %735 = vdwg.mxu0
    %v736 = vmax.f32 %v733, 0.0
    %v737 = vld [vmem:[%s5] sm:$0xff]
    %v738 = vld [vmem:[%s5 + $0x8] sm:$0xff]
    %v739 = vld [vmem:[%s5 + $0x10] sm:$0xff]
    %v740 = vld [vmem:[%s5 + $0x18] sm:$0xff]
    %v741 = vld [vmem:[%s5 + $0x20] sm:$0xff]
    %v742 = vld [vmem:[%s5 + $0x28] sm:$0xff]
    %v743 = vld [vmem:[%s5 + $0x30] sm:$0xff]
    %v744 = vld [vmem:[%s5 + $0x38] sm:$0xff]
    %v745 = vld [vmem:[%s5 + $0x40] sm:$0xff]
    %v746 = vld [vmem:[%s5 + $0x48] sm:$0xff]
    %v747 = vld [vmem:[%s5 + $0x50] sm:$0xff]
    %v748 = vld [vmem:[%s5 + $0x58] sm:$0xff]
    %v749 = vld [vmem:[%s5 + $0x60] sm:$0xff]
    %v750 = vld [vmem:[%s5 + $0x68] sm:$0xff]
    %v751 = vld [vmem:[%s5 + $0x70] sm:$0xff]
    %v752 = vld [vmem:[%s5 + $0x78] sm:$0xff]
    %v753 = vlaneseq
    %v754 = vshrl.u32 %v753, 7
    %v755 = vsub.s32 0, %v754
    %v756 = vrot.slane %v39, %v755
    %757 = vmatprep.subr.mxu0 0.0
    %758 = vmatpush1.msra.mxu0 %v752
    %759 = vmatprep.subr.mxu0 0.0
    %760 = vmatpush1.msra.mxu0 %v751
    %761 = vmatprep.subr.mxu0 0.0
    %762 = vmatpush1.msra.mxu0 %v750
    %763 = vmatprep.subr.mxu0 0.0
    %764 = vmatpush1.msra.mxu0 %v749
    %765 = vmatprep.subr.mxu0 0.0
    %766 = vmatpush1.msra.mxu0 %v748
    %767 = vmatprep.subr.mxu0 0.0
    %768 = vmatpush1.msra.mxu0 %v747
    %769 = vmatprep.subr.mxu0 0.0
    %770 = vmatpush1.msra.mxu0 %v746
    %771 = vmatprep.subr.mxu0 0.0
    %772 = vmatpush1.msra.mxu0 %v745
    %773 = vmatprep.subr.mxu0 0.0
    %774 = vmatpush1.msra.mxu0 %v744
    %775 = vmatprep.subr.mxu0 0.0
    %776 = vmatpush1.msra.mxu0 %v743
    %777 = vmatprep.subr.mxu0 0.0
    %778 = vmatpush1.msra.mxu0 %v742
    %779 = vmatprep.subr.mxu0 0.0
    %780 = vmatpush1.msra.mxu0 %v741
    %781 = vmatprep.subr.mxu0 0.0
    %782 = vmatpush1.msra.mxu0 %v740
    %783 = vmatprep.subr.mxu0 0.0
    %784 = vmatpush1.msra.mxu0 %v739
    %785 = vmatprep.subr.mxu0 0.0
    %786 = vmatpush1.msra.mxu0 %v738
    %787 = vmatprep.subr.mxu0 0.0
    %788 = vmatpush1.msra.mxu0 %v737
    %789 = vmatprep.subr.mxu0 0.0
    %790 = vmatpush2.msra.mxu0 0.0
    %791 = vmatprep.subr.mxu0 0.0
    %792 = vmatpush2.msra.mxu0 0.0
    %793 = vmatprep.subr.mxu0 0.0
    %794 = vmatpush2.msra.mxu0 0.0
    %795 = vmatprep.subr.mxu0 0.0
    %796 = vmatpush2.msra.mxu0 0.0
    %797 = vmatprep.subr.mxu0 0.0
    %798 = vmatpush2.msra.mxu0 0.0
    %799 = vmatprep.subr.mxu0 0.0
    %800 = vmatpush2.msra.mxu0 0.0
    %801 = vmatprep.subr.mxu0 0.0
    %802 = vmatpush2.msra.mxu0 0.0
    %803 = vmatprep.subr.mxu0 0.0
    %804 = vmatpush2.msra.mxu0 0.0
    %805 = vmatprep.subr.mxu0 0.0
    %806 = vmatpush2.msra.mxu0 0.0
    %807 = vmatprep.subr.mxu0 0.0
    %808 = vmatpush2.msra.mxu0 0.0
    %809 = vmatprep.subr.mxu0 0.0
    %810 = vmatpush2.msra.mxu0 0.0
    %811 = vmatprep.subr.mxu0 0.0
    %812 = vmatpush2.msra.mxu0 0.0
    %813 = vmatprep.subr.mxu0 0.0
    %814 = vmatpush2.msra.mxu0 0.0
    %815 = vmatprep.subr.mxu0 0.0
    %816 = vmatpush2.msra.mxu0 0.0
    %817 = vmatprep.subr.mxu0 0.0
    %818 = vmatpush2.msra.mxu0 0.0
    %819 = vmatprep.subr.mxu0 0.0
    %820 = vmatpush2.msra.mxu0 0.0
    %821 = vmatprep.mubr.f32.mxu0 0.0
    %822 = vmatmul.mubr.f32.gmra.mxu0 %v736
    %v823 = vpop.f32.mrf.mxu0
    %v824 = vadd.f32 %v756, %v823
    %v825 = vpop.f32.mrf.mxu0
    %826 = vdwg.mxu0
    %vm827 = vcmask 25600
    %828 = vst.msk [vmem:[#allocation2] sm:$0x3] %vm827, %v824
    // Predicated region
    $region42: #{agent_dqn_forward.1} parent=1 // pred_check
      _
    $region43: #{agent_dqn_forward.1} parent=1 // pred_check_branch
      %830 = sbr.rel (0) target = $region45
    $region44: #{agent_dqn_forward.1} parent=1 // pred_region
      %s832 = ssub.s32 32, 32
      %833 = vsyncadd [#allocation3], %s832
      %s835 = sshll.u32 [#allocation2], 4
      %s836 = int_to_ptr.vmem [resolvable:$true] %s835
      %838 = dma.vmem_to_hbm [thread:$0]  %s836, 32, %s10, [#allocation3]
    $region45: #{agent_dqn_forward.1} parent=1 // pred_fallthru
      _
    // Predicated region
    $region46: #{agent_dqn_forward.1} parent=1 // pred_check
      _
    $region47: #{agent_dqn_forward.1} parent=1 // pred_check_branch
      %840 = sbr.rel (0) target = $region49
    $region48: #{agent_dqn_forward.1} parent=1 // pred_region
      %841 = dma.done [#allocation3], 32
    $region49: #{agent_dqn_forward.1} parent=1 // pred_fallthru
      _
    %842 = vsyncpa [#allocation3], 1

</llo_original>
